<compile_context>
chip_gen: v6e
topology: v6e:2x2x1
jax: 0.10.0
libtpu: 0.0.40
codegen_flags: <defaults>
</compile_context>

<pallas_src>
import jax
import jax.numpy as jnp
from jax.experimental import pallas as pl
from jax.experimental.pallas import tpu as pltpu

STATE_DIM = 4      # CartPole-v1 observation_space.shape[0]
ACTION_DIM = 2     # CartPole-v1 action_space.n
HIDDEN = 24

LANE = 128         # hidden width padded to one lane tile
OUT_PAD = 8        # action dim padded only to the sublane quantum (not 128)
MAX_TILE_B = 2048  # max batch rows per grid step (v5e-safe VMEM footprint)


def _cdiv(a, b):
    return -(-a // b)


def _round_up(n, m):
    return ((n + m - 1) // m) * m


def _pad_to(x, rows, cols):
    r, c = x.shape
    return jnp.pad(x, ((0, rows - r), (0, cols - c)))


def dqn_kernel(x_ref, w1_ref, b1_ref, w2_ref, b2_ref, w3_ref, b3_ref, o_ref):
    # Fused: 3 matmuls (MXU) + bias/ReLU (VPU) on one batch tile.
    x = x_ref[...]
    h1 = jnp.dot(x, w1_ref[...], preferred_element_type=jnp.float32) + b1_ref[...]
    h1 = jnp.maximum(h1, 0.0)
    h2 = jnp.dot(h1, w2_ref[...], preferred_element_type=jnp.float32) + b2_ref[...]
    h2 = jnp.maximum(h2, 0.0)
    o_ref[...] = jnp.dot(h2, w3_ref[...], preferred_element_type=jnp.float32) + b3_ref[...]


def prepare_params(params):
    """Pad weights/biases to TPU-friendly shapes ONCE (hoisted out of forward).

    Zero padding keeps the math exact: padded hidden columns get 0 weight and
    0 bias and stay 0 through ReLU; padded output columns are never read.
    """
    return {
        "w1": _pad_to(params["w1"].astype(jnp.float32), STATE_DIM, LANE),      # (4, 128)
        "w2": _pad_to(params["w2"].astype(jnp.float32), LANE, LANE),           # (128, 128)
        "w3": _pad_to(params["w3"].astype(jnp.float32), LANE, OUT_PAD),        # (128, 8)
        "b1": _pad_to(params["b1"].astype(jnp.float32)[None, :], 1, LANE),     # (1, 128)
        "b2": _pad_to(params["b2"].astype(jnp.float32)[None, :], 1, LANE),     # (1, 128)
        "b3": _pad_to(params["b3"].astype(jnp.float32)[None, :], 1, OUT_PAD),  # (1, 8)
    }


def dqn_forward(x, padded_params):
    """x: [B, STATE_DIM] float32 (unpadded). padded_params: prepare_params() output."""
    b = x.shape[0]

    # Waste-aware tiling: balance rows across the minimum number of tiles.
    n_tiles = _cdiv(b, MAX_TILE_B)
    if n_tiles > 1 and n_tiles % 2:
        n_tiles += 1                       # even tile count -> balanced v7x megacore split
    tile_b = _round_up(_cdiv(b, n_tiles), 8)
    n_tiles = _cdiv(b, tile_b)             # drop any tile left empty by the 8-row rounding
    b_pad = n_tiles * tile_b               # only the OUTPUT is padded; x stays [B, 4]

    x = x.astype(jnp.float32)

    const = lambda shape: pl.BlockSpec(shape, lambda i: (0, 0))  # VMEM-resident operand

    out_p = pl.pallas_call(
        dqn_kernel,
        out_shape=jax.ShapeDtypeStruct((b_pad, OUT_PAD), jnp.float32),
        grid=(n_tiles,),
        in_specs=[
            # x tile (pipelined); last block may be ragged -> OOB rows are garbage
            # but their output rows land in [b:b_pad] and are sliced off below.
            pl.BlockSpec((tile_b, STATE_DIM), lambda i: (i, 0)),
            const((STATE_DIM, LANE)),   # w1
            const((1, LANE)),           # b1
            const((LANE, LANE)),        # w2
            const((1, LANE)),           # b2
            const((LANE, OUT_PAD)),     # w3
            const((1, OUT_PAD)),        # b3
        ],
        out_specs=pl.BlockSpec((tile_b, OUT_PAD), lambda i: (i, 0)),
        compiler_params=pltpu.CompilerParams(
            dimension_semantics=("parallel",),   # batch axis shards across v7x's 2 TCs
        ),
    )(
        x,
        padded_params["w1"], padded_params["b1"],
        padded_params["w2"], padded_params["b2"],
        padded_params["w3"], padded_params["b3"],
    )

    return out_p[:b, :ACTION_DIM]


def init_params(key):
    """Deterministic init matching nn.Linear shapes (weights stored as (in, out))."""
    ks = jax.random.split(key, 6)

    def lin(kw, kb, fan_in, fan_out):
        bound = 1.0 / jnp.sqrt(fan_in)
        w = jax.random.uniform(kw, (fan_in, fan_out), jnp.float32, -bound, bound)
        b = jax.random.uniform(kb, (fan_out,), jnp.float32, -bound, bound)
        return w, b

    w1, b1 = lin(ks[0], ks[1], STATE_DIM, HIDDEN)
    w2, b2 = lin(ks[2], ks[3], HIDDEN, HIDDEN)
    w3, b3 = lin(ks[4], ks[5], HIDDEN, ACTION_DIM)
    return {"w1": w1, "b1": b1, "w2": w2, "b2": b2, "w3": w3, "b3": b3}


def dqn_ref(x, p):
    h1 = jnp.maximum(x @ p["w1"] + p["b1"], 0.0)
    h2 = jnp.maximum(h1 @ p["w2"] + p["b2"], 0.0)
    return h2 @ p["w3"] + p["b3"]


if __name__ == "__main__":
    key = jax.random.PRNGKey(0)
    kp, kx1, kx2, kx3 = jax.random.split(key, 4)
    params = init_params(kp)
    padded = jax.tree.map(jax.block_until_ready, prepare_params(params))  # pad once

    # 1) Small action-selection batch (single ragged grid step, b < 8).
    x_small = jax.random.normal(kx1, (2, STATE_DIM), jnp.float32)
    out_small = jax.block_until_ready(dqn_forward(x_small, padded))
    ref_small = dqn_ref(x_small, params)
    assert out_small.shape == (2, ACTION_DIM), out_small.shape
    assert jnp.allclose(out_small, ref_small, atol=1e-5, rtol=1e-5)

    # 2) Training-style batch: fits in one waste-free 600-row tile.
    x_big = jax.random.normal(kx2, (600, STATE_DIM), jnp.float32)
    out_big = jax.block_until_ready(dqn_forward(x_big, padded))
    ref_big = dqn_ref(x_big, params)
    assert out_big.shape == (600, ACTION_DIM), out_big.shape
    assert jnp.allclose(out_big, ref_big, atol=1e-5, rtol=1e-5)

    # 3) Large batch: exercises the multi-tile pipelined path (even tile count,
    #    ragged final x block).
    x_huge = jax.random.normal(kx3, (5000, STATE_DIM), jnp.float32)
    out_huge = jax.block_until_ready(dqn_forward(x_huge, padded))
    ref_huge = dqn_ref(x_huge, params)
    assert out_huge.shape == (5000, ACTION_DIM), out_huge.shape
    assert jnp.allclose(out_huge, ref_huge, atol=1e-5, rtol=1e-5)

    print("KERNEL_OK")
</pallas_src>

<mosaic_0001>
module attributes {stable_mosaic.version = 11 : i64} {
  func.func @dqn_kernel(%arg0: i32, %arg1: memref<8x4xf32, #tpu.memory_space<vmem>>, %arg2: memref<4x128xf32, #tpu.memory_space<vmem>>, %arg3: memref<1x128xf32, #tpu.memory_space<vmem>>, %arg4: memref<128x128xf32, #tpu.memory_space<vmem>>, %arg5: memref<1x128xf32, #tpu.memory_space<vmem>>, %arg6: memref<128x8xf32, #tpu.memory_space<vmem>>, %arg7: memref<1x8xf32, #tpu.memory_space<vmem>>, %arg8: memref<8x8xf32, #tpu.memory_space<vmem>>) attributes {dimension_semantics = [#tpu.dimension_semantics<parallel>], iteration_bounds = array<i64: 1>, scalar_prefetch = 0 : i64, scratch_operands = 0 : i64, tpu.core_type = #tpu.core_type<tc>, window_params = [{transform_indices = @transform_0, window_bounds = array<i64: 8, 4>}, {pipeline_mode = #tpu.pipeline_mode<synchronous>, transform_indices = @transform_1, window_bounds = array<i64: 4, 128>}, {pipeline_mode = #tpu.pipeline_mode<synchronous>, transform_indices = @transform_2, window_bounds = array<i64: 1, 128>}, {pipeline_mode = #tpu.pipeline_mode<synchronous>, transform_indices = @transform_3, window_bounds = array<i64: 128, 128>}, {pipeline_mode = #tpu.pipeline_mode<synchronous>, transform_indices = @transform_4, window_bounds = array<i64: 1, 128>}, {pipeline_mode = #tpu.pipeline_mode<synchronous>, transform_indices = @transform_5, window_bounds = array<i64: 128, 8>}, {pipeline_mode = #tpu.pipeline_mode<synchronous>, transform_indices = @transform_6, window_bounds = array<i64: 1, 8>}, {transform_indices = @transform_7, window_bounds = array<i64: 8, 8>}]} {
    %c0 = arith.constant 0 : index
    %c0_0 = arith.constant 0 : index
    %0 = vector.load %arg1[%c0, %c0_0] : memref<8x4xf32, #tpu.memory_space<vmem>>, vector<8x4xf32>
    %c0_1 = arith.constant 0 : index
    %c0_2 = arith.constant 0 : index
    %1 = vector.load %arg2[%c0_1, %c0_2] : memref<4x128xf32, #tpu.memory_space<vmem>>, vector<4x128xf32>
    %cst = arith.constant dense<0.000000e+00> : vector<8x128xf32>
    %2 = tpu.matmul %0, %1, %cst {dimension_numbers = #tpu.dot_dimension_numbers<[1], [0], [0], [1], [0, 0, 1, 1], [], []>} : vector<8x4xf32>, vector<4x128xf32>, vector<8x128xf32> -> vector<8x128xf32>
    %c0_3 = arith.constant 0 : index
    %c0_4 = arith.constant 0 : index
    %3 = vector.load %arg3[%c0_3, %c0_4] : memref<1x128xf32, #tpu.memory_space<vmem>>, vector<1x128xf32>
    %4 = vector.broadcast %3 : vector<1x128xf32> to vector<8x128xf32>
    %5 = arith.addf %2, %4 : vector<8x128xf32>
    %cst_5 = arith.constant 0.000000e+00 : f32
    %6 = vector.broadcast %cst_5 : f32 to vector<8x128xf32>
    %7 = arith.maximumf %5, %6 : vector<8x128xf32>
    %c0_6 = arith.constant 0 : index
    %c0_7 = arith.constant 0 : index
    %8 = vector.load %arg4[%c0_6, %c0_7] : memref<128x128xf32, #tpu.memory_space<vmem>>, vector<128x128xf32>
    %cst_8 = arith.constant dense<0.000000e+00> : vector<8x128xf32>
    %9 = tpu.matmul %7, %8, %cst_8 {dimension_numbers = #tpu.dot_dimension_numbers<[1], [0], [0], [1], [0, 0, 1, 1], [], []>} : vector<8x128xf32>, vector<128x128xf32>, vector<8x128xf32> -> vector<8x128xf32>
    %c0_9 = arith.constant 0 : index
    %c0_10 = arith.constant 0 : index
    %10 = vector.load %arg5[%c0_9, %c0_10] : memref<1x128xf32, #tpu.memory_space<vmem>>, vector<1x128xf32>
    %11 = vector.broadcast %10 : vector<1x128xf32> to vector<8x128xf32>
    %12 = arith.addf %9, %11 : vector<8x128xf32>
    %cst_11 = arith.constant 0.000000e+00 : f32
    %13 = vector.broadcast %cst_11 : f32 to vector<8x128xf32>
    %14 = arith.maximumf %12, %13 : vector<8x128xf32>
    %c0_12 = arith.constant 0 : index
    %c0_13 = arith.constant 0 : index
    %15 = vector.load %arg6[%c0_12, %c0_13] : memref<128x8xf32, #tpu.memory_space<vmem>>, vector<128x8xf32>
    %cst_14 = arith.constant dense<0.000000e+00> : vector<8x8xf32>
    %16 = tpu.matmul %14, %15, %cst_14 {dimension_numbers = #tpu.dot_dimension_numbers<[1], [0], [0], [1], [0, 0, 1, 1], [], []>} : vector<8x128xf32>, vector<128x8xf32>, vector<8x8xf32> -> vector<8x8xf32>
    %c0_15 = arith.constant 0 : index
    %c0_16 = arith.constant 0 : index
    %17 = vector.load %arg7[%c0_15, %c0_16] : memref<1x8xf32, #tpu.memory_space<vmem>>, vector<1x8xf32>
    %18 = vector.broadcast %17 : vector<1x8xf32> to vector<8x8xf32>
    %19 = arith.addf %16, %18 : vector<8x8xf32>
    %c0_17 = arith.constant 0 : index
    %c0_18 = arith.constant 0 : index
    %20 = vector.load %arg8[%c0_17, %c0_18] : memref<8x8xf32, #tpu.memory_space<vmem>>, vector<8x8xf32>
    tpu.vector_store %arg8[%c0_17, %c0_18], %19 {strides = array<i32>} : memref<8x8xf32, #tpu.memory_space<vmem>>, vector<8x8xf32>,
    return
  }
  func.func @transform_0(%arg0: i32) -> (i32, i32) {
    %c0_i32 = arith.constant 0 : i32
    %c0_i32_0 = arith.constant 0 : i32
    return %arg0, %c0_i32 : i32, i32
  }
  func.func @transform_1(%arg0: i32) -> (i32, i32) {
    %c0_i32 = arith.constant 0 : i32
    %c0_i32_0 = arith.constant 0 : i32
    %c0_i32_1 = arith.constant 0 : i32
    return %c0_i32, %c0_i32_0 : i32, i32
  }
  func.func @transform_2(%arg0: i32) -> (i32, i32) {
    %c0_i32 = arith.constant 0 : i32
    %c0_i32_0 = arith.constant 0 : i32
    %c0_i32_1 = arith.constant 0 : i32
    return %c0_i32, %c0_i32_0 : i32, i32
  }
  func.func @transform_3(%arg0: i32) -> (i32, i32) {
    %c0_i32 = arith.constant 0 : i32
    %c0_i32_0 = arith.constant 0 : i32
    %c0_i32_1 = arith.constant 0 : i32
    return %c0_i32, %c0_i32_0 : i32, i32
  }
  func.func @transform_4(%arg0: i32) -> (i32, i32) {
    %c0_i32 = arith.constant 0 : i32
    %c0_i32_0 = arith.constant 0 : i32
    %c0_i32_1 = arith.constant 0 : i32
    return %c0_i32, %c0_i32_0 : i32, i32
  }
  func.func @transform_5(%arg0: i32) -> (i32, i32) {
    %c0_i32 = arith.constant 0 : i32
    %c0_i32_0 = arith.constant 0 : i32
    %c0_i32_1 = arith.constant 0 : i32
    return %c0_i32, %c0_i32_0 : i32, i32
  }
  func.func @transform_6(%arg0: i32) -> (i32, i32) {
    %c0_i32 = arith.constant 0 : i32
    %c0_i32_0 = arith.constant 0 : i32
    %c0_i32_1 = arith.constant 0 : i32
    return %c0_i32, %c0_i32_0 : i32, i32
  }
  func.func @transform_7(%arg0: i32) -> (i32, i32) {
    %c0_i32 = arith.constant 0 : i32
    %c0_i32_0 = arith.constant 0 : i32
    return %arg0, %c0_i32 : i32, i32
  }
}

</mosaic_0001>

<llo_original>
// kernel: tpu_custom_call.1
$region0: #{tpu_custom_call.1}
  #allocation0 [shape = 'u32[]', space=smem, size = 0x4, offset = 0x4, fixed_abs, tag = 'smem constant byte address 0x4 - core index']
  #allocation1 [shape = 'u32[144,128]{1,0:T(1,128)}', space=vmem, size = 0x12000, scoped, tag = 'internal scratch']
  %s0 = inlined_call_operand.vmem [shape: f32[2,4], index: 0, kind: input, shape index: {}]
  %s1 = inlined_call_operand.vmem [shape: f32[4,128], index: 1, kind: input, shape index: {}]
  %s2 = inlined_call_operand.vmem [shape: f32[1,128], index: 2, kind: input, shape index: {}]
  %s3 = inlined_call_operand.vmem [shape: f32[128,128], index: 3, kind: input, shape index: {}]
  %s4 = inlined_call_operand.vmem [shape: f32[1,128], index: 4, kind: input, shape index: {}]
  %s5 = inlined_call_operand.vmem [shape: f32[128,8], index: 5, kind: input, shape index: {}]
  %s6 = inlined_call_operand.vmem [shape: f32[1,8], index: 6, kind: input, shape index: {}]
  %s7 = inlined_call_operand.hbm [shape: f32[8,8], index: 7, kind: output, shape index: {}]
  %s8 = sld [smem:[#allocation0]]
  $region38: #{tpu_custom_call.1} parent=0
    _
  %s10 = ssub.s32 1, %s8
  %s11 = scalar_select 0, %s10, %s8
  $region1: #{tpu_custom_call.1} parent=0
    #allocation2 [shape = 'u8[4096]{0}', space=vmem, size = 0x1000, scoped, tag = 'output window, operand 0, single buffered']
    #allocation3 [shape = 's32[1]{0}', space=sflag, size = 0x4, scoped, tag = 'scoped memory for tpu_custom_call.1']
    %12 = vsyncpa [#allocation3], 0
    // Predicated region
    $region2: #{tpu_custom_call.1} parent=1 // pred_check
      _
    $region3: #{tpu_custom_call.1} parent=1 // pred_check_branch
      %14 = sbr.rel (0) target = $region5
    $region4: #{tpu_custom_call.1} parent=1 // pred_region
      _
    $region5: #{tpu_custom_call.1} parent=1 // pred_fallthru
      _
    // Predicated region
    $region6: #{tpu_custom_call.1} parent=1 // pred_check
      _
    $region7: #{tpu_custom_call.1} parent=1 // pred_check_branch
      %16 = sbr.rel (0) target = $region9
    $region8: #{tpu_custom_call.1} parent=1 // pred_region
      _
    $region9: #{tpu_custom_call.1} parent=1 // pred_fallthru
      _
    // Predicated region
    $region10: #{tpu_custom_call.1} parent=1 // pred_check
      _
    $region11: #{tpu_custom_call.1} parent=1 // pred_check_branch
      %18 = sbr.rel (0) target = $region13
    $region12: #{tpu_custom_call.1} parent=1 // pred_region
      _
    $region13: #{tpu_custom_call.1} parent=1 // pred_fallthru
      _
    // Predicated region
    $region14: #{tpu_custom_call.1} parent=1 // pred_check
      _
    $region15: #{tpu_custom_call.1} parent=1 // pred_check_branch
      %20 = sbr.rel (0) target = $region17
    $region16: #{tpu_custom_call.1} parent=1 // pred_region
      _
    $region17: #{tpu_custom_call.1} parent=1 // pred_fallthru
      _
    // Predicated region
    $region18: #{tpu_custom_call.1} parent=1 // pred_check
      _
    $region19: #{tpu_custom_call.1} parent=1 // pred_check_branch
      %22 = sbr.rel (0) target = $region21
    $region20: #{tpu_custom_call.1} parent=1 // pred_region
      _
    $region21: #{tpu_custom_call.1} parent=1 // pred_fallthru
      _
    // Predicated region
    $region22: #{tpu_custom_call.1} parent=1 // pred_check
      _
    $region23: #{tpu_custom_call.1} parent=1 // pred_check_branch
      %24 = sbr.rel (0) target = $region25
    $region24: #{tpu_custom_call.1} parent=1 // pred_region
      _
    $region25: #{tpu_custom_call.1} parent=1 // pred_fallthru
      _
    // Predicated region
    $region26: #{tpu_custom_call.1} parent=1 // pred_check
      _
    $region27: #{tpu_custom_call.1} parent=1 // pred_check_branch
      %26 = sbr.rel (0) target = $region29
    $region28: #{tpu_custom_call.1} parent=1 // pred_region
      _
    $region29: #{tpu_custom_call.1} parent=1 // pred_fallthru
      _
    %v27 = vld [vmem:[%s0] sm:$0xff]
    %v28 = vld [vmem:[%s1] sm:$0xf]
    %v29 = vld [vmem:[%s2] sm:$0x1]
    %v31 = vlaneseq
    %v32 = vshrl.u32 %v31, 7
    %v33 = vsub.s32 0, %v32
    %v34 = vrot.slane %v29, %v33
    %vm36 = vcmask 31744
    %v38 = vsel %vm36, %v27, 0
    %vm40 = vcmask 1043456
    %v42 = vsel %vm40, %v28, 0
    %44 = vmatprep.subr.mxu0 0.0
    %45 = vmatpush1.msra.mxu0 0.0
    %46 = vmatprep.subr.mxu0 0.0
    %47 = vmatpush1.msra.mxu0 0.0
    %48 = vmatprep.subr.mxu0 0.0
    %49 = vmatpush1.msra.mxu0 0.0
    %50 = vmatprep.subr.mxu0 0.0
    %51 = vmatpush1.msra.mxu0 0.0
    %52 = vmatprep.subr.mxu0 0.0
    %53 = vmatpush1.msra.mxu0 0.0
    %54 = vmatprep.subr.mxu0 0.0
    %55 = vmatpush1.msra.mxu0 0.0
    %56 = vmatprep.subr.mxu0 0.0
    %57 = vmatpush1.msra.mxu0 0.0
    %58 = vmatprep.subr.mxu0 0.0
    %59 = vmatpush1.msra.mxu0 0.0
    %60 = vmatprep.subr.mxu0 0.0
    %61 = vmatpush1.msra.mxu0 0.0
    %62 = vmatprep.subr.mxu0 0.0
    %63 = vmatpush1.msra.mxu0 0.0
    %64 = vmatprep.subr.mxu0 0.0
    %65 = vmatpush1.msra.mxu0 0.0
    %66 = vmatprep.subr.mxu0 0.0
    %67 = vmatpush1.msra.mxu0 0.0
    %68 = vmatprep.subr.mxu0 0.0
    %69 = vmatpush1.msra.mxu0 0.0
    %70 = vmatprep.subr.mxu0 0.0
    %71 = vmatpush1.msra.mxu0 0.0
    %72 = vmatprep.subr.mxu0 0.0
    %73 = vmatpush1.msra.mxu0 0.0
    %74 = vmatprep.subr.mxu0 0.0
    %75 = vmatpush1.msra.mxu0 %v42
    %76 = vmatprep.subr.mxu0 0.0
    %77 = vmatpush2.msra.mxu0 0.0
    %78 = vmatprep.subr.mxu0 0.0
    %79 = vmatpush2.msra.mxu0 0.0
    %80 = vmatprep.subr.mxu0 0.0
    %81 = vmatpush2.msra.mxu0 0.0
    %82 = vmatprep.subr.mxu0 0.0
    %83 = vmatpush2.msra.mxu0 0.0
    %84 = vmatprep.subr.mxu0 0.0
    %85 = vmatpush2.msra.mxu0 0.0
    %86 = vmatprep.subr.mxu0 0.0
    %87 = vmatpush2.msra.mxu0 0.0
    %88 = vmatprep.subr.mxu0 0.0
    %89 = vmatpush2.msra.mxu0 0.0
    %90 = vmatprep.subr.mxu0 0.0
    %91 = vmatpush2.msra.mxu0 0.0
    %92 = vmatprep.subr.mxu0 0.0
    %93 = vmatpush2.msra.mxu0 0.0
    %94 = vmatprep.subr.mxu0 0.0
    %95 = vmatpush2.msra.mxu0 0.0
    %96 = vmatprep.subr.mxu0 0.0
    %97 = vmatpush2.msra.mxu0 0.0
    %98 = vmatprep.subr.mxu0 0.0
    %99 = vmatpush2.msra.mxu0 0.0
    %100 = vmatprep.subr.mxu0 0.0
    %101 = vmatpush2.msra.mxu0 0.0
    %102 = vmatprep.subr.mxu0 0.0
    %103 = vmatpush2.msra.mxu0 0.0
    %104 = vmatprep.subr.mxu0 0.0
    %105 = vmatpush2.msra.mxu0 0.0
    %106 = vmatprep.subr.mxu0 0.0
    %107 = vmatpush2.msra.mxu0 0.0
    %108 = vmatprep.mubr.f32.mxu0 0.0
    %109 = vmatmul.mubr.f32.gmra.mxu0 %v38
    %v110 = vpop.f32.mrf.mxu0
    %v111 = vadd.f32 %v34, %v110
    %v112 = vpop.f32.mrf.mxu0
    %113 = vdwg.mxu0
    %v114 = vmax.f32 %v111, 0.0
    %v115 = vld [vmem:[%s3] sm:$0xff]
    %v116 = vld [vmem:[%s3 + $0x8] sm:$0xff]
    %v117 = vld [vmem:[%s3 + $0x10] sm:$0xff]
    %v118 = vld [vmem:[%s3 + $0x18] sm:$0xff]
    %v119 = vld [vmem:[%s3 + $0x20] sm:$0xff]
    %v120 = vld [vmem:[%s3 + $0x28] sm:$0xff]
    %v121 = vld [vmem:[%s3 + $0x30] sm:$0xff]
    %v122 = vld [vmem:[%s3 + $0x38] sm:$0xff]
    %v123 = vld [vmem:[%s3 + $0x40] sm:$0xff]
    %v124 = vld [vmem:[%s3 + $0x48] sm:$0xff]
    %v125 = vld [vmem:[%s3 + $0x50] sm:$0xff]
    %v126 = vld [vmem:[%s3 + $0x58] sm:$0xff]
    %v127 = vld [vmem:[%s3 + $0x60] sm:$0xff]
    %v128 = vld [vmem:[%s3 + $0x68] sm:$0xff]
    %v129 = vld [vmem:[%s3 + $0x70] sm:$0xff]
    %v130 = vld [vmem:[%s3 + $0x78] sm:$0xff]
    %v131 = vld [vmem:[%s4] sm:$0x1]
    %v133 = vlaneseq
    %v134 = vshrl.u32 %v133, 7
    %v135 = vsub.s32 0, %v134
    %v136 = vrot.slane %v131, %v135
    %138 = vmatprep.subr.mxu0 0.0
    %139 = vmatpush1.msra.mxu0 %v130
    %140 = vmatprep.subr.mxu0 0.0
    %141 = vmatpush1.msra.mxu0 %v129
    %142 = vmatprep.subr.mxu0 0.0
    %143 = vmatpush1.msra.mxu0 %v128
    %144 = vmatprep.subr.mxu0 0.0
    %145 = vmatpush1.msra.mxu0 %v127
    %146 = vmatprep.subr.mxu0 0.0
    %147 = vmatpush1.msra.mxu0 %v126
    %148 = vmatprep.subr.mxu0 0.0
    %149 = vmatpush1.msra.mxu0 %v125
    %150 = vmatprep.subr.mxu0 0.0
    %151 = vmatpush1.msra.mxu0 %v124
    %152 = vmatprep.subr.mxu0 0.0
    %153 = vmatpush1.msra.mxu0 %v123
    %154 = vmatprep.subr.mxu0 0.0
    %155 = vmatpush1.msra.mxu0 %v122
    %156 = vmatprep.subr.mxu0 0.0
    %157 = vmatpush1.msra.mxu0 %v121
    %158 = vmatprep.subr.mxu0 0.0
    %159 = vmatpush1.msra.mxu0 %v120
    %160 = vmatprep.subr.mxu0 0.0
    %161 = vmatpush1.msra.mxu0 %v119
    %162 = vmatprep.subr.mxu0 0.0
    %163 = vmatpush1.msra.mxu0 %v118
    %164 = vmatprep.subr.mxu0 0.0
    %165 = vmatpush1.msra.mxu0 %v117
    %166 = vmatprep.subr.mxu0 0.0
    %167 = vmatpush1.msra.mxu0 %v116
    %168 = vmatprep.subr.mxu0 0.0
    %169 = vmatpush1.msra.mxu0 %v115
    %170 = vmatprep.subr.mxu0 0.0
    %171 = vmatpush2.msra.mxu0 0.0
    %172 = vmatprep.subr.mxu0 0.0
    %173 = vmatpush2.msra.mxu0 0.0
    %174 = vmatprep.subr.mxu0 0.0
    %175 = vmatpush2.msra.mxu0 0.0
    %176 = vmatprep.subr.mxu0 0.0
    %177 = vmatpush2.msra.mxu0 0.0
    %178 = vmatprep.subr.mxu0 0.0
    %179 = vmatpush2.msra.mxu0 0.0
    %180 = vmatprep.subr.mxu0 0.0
    %181 = vmatpush2.msra.mxu0 0.0
    %182 = vmatprep.subr.mxu0 0.0
    %183 = vmatpush2.msra.mxu0 0.0
    %184 = vmatprep.subr.mxu0 0.0
    %185 = vmatpush2.msra.mxu0 0.0
    %186 = vmatprep.subr.mxu0 0.0
    %187 = vmatpush2.msra.mxu0 0.0
    %188 = vmatprep.subr.mxu0 0.0
    %189 = vmatpush2.msra.mxu0 0.0
    %190 = vmatprep.subr.mxu0 0.0
    %191 = vmatpush2.msra.mxu0 0.0
    %192 = vmatprep.subr.mxu0 0.0
    %193 = vmatpush2.msra.mxu0 0.0
    %194 = vmatprep.subr.mxu0 0.0
    %195 = vmatpush2.msra.mxu0 0.0
    %196 = vmatprep.subr.mxu0 0.0
    %197 = vmatpush2.msra.mxu0 0.0
    %198 = vmatprep.subr.mxu0 0.0
    %199 = vmatpush2.msra.mxu0 0.0
    %200 = vmatprep.subr.mxu0 0.0
    %201 = vmatpush2.msra.mxu0 0.0
    %202 = vmatprep.mubr.f32.mxu0 0.0
    %203 = vmatmul.mubr.f32.gmra.mxu0 %v114
    %v204 = vpop.f32.mrf.mxu0
    %v205 = vadd.f32 %v136, %v204
    %v206 = vpop.f32.mrf.mxu0
    %207 = vdwg.mxu0
    %v208 = vmax.f32 %v205, 0.0
    %v209 = vld [vmem:[%s5] sm:$0xff]
    %v210 = vld [vmem:[%s5 + $0x8] sm:$0xff]
    %v211 = vld [vmem:[%s5 + $0x10] sm:$0xff]
    %v212 = vld [vmem:[%s5 + $0x18] sm:$0xff]
    %v213 = vld [vmem:[%s5 + $0x20] sm:$0xff]
    %v214 = vld [vmem:[%s5 + $0x28] sm:$0xff]
    %v215 = vld [vmem:[%s5 + $0x30] sm:$0xff]
    %v216 = vld [vmem:[%s5 + $0x38] sm:$0xff]
    %v217 = vld [vmem:[%s5 + $0x40] sm:$0xff]
    %v218 = vld [vmem:[%s5 + $0x48] sm:$0xff]
    %v219 = vld [vmem:[%s5 + $0x50] sm:$0xff]
    %v220 = vld [vmem:[%s5 + $0x58] sm:$0xff]
    %v221 = vld [vmem:[%s5 + $0x60] sm:$0xff]
    %v222 = vld [vmem:[%s5 + $0x68] sm:$0xff]
    %v223 = vld [vmem:[%s5 + $0x70] sm:$0xff]
    %v224 = vld [vmem:[%s5 + $0x78] sm:$0xff]
    %v225 = vld [vmem:[%s6] sm:$0x1]
    %v227 = vlaneseq
    %v228 = vshrl.u32 %v227, 7
    %v229 = vsub.s32 0, %v228
    %v230 = vrot.slane %v225, %v229
    %232 = vmatprep.subr.mxu0 0.0
    %233 = vmatpush1.msra.mxu0 %v224
    %234 = vmatprep.subr.mxu0 0.0
    %235 = vmatpush1.msra.mxu0 %v223
    %236 = vmatprep.subr.mxu0 0.0
    %237 = vmatpush1.msra.mxu0 %v222
    %238 = vmatprep.subr.mxu0 0.0
    %239 = vmatpush1.msra.mxu0 %v221
    %240 = vmatprep.subr.mxu0 0.0
    %241 = vmatpush1.msra.mxu0 %v220
    %242 = vmatprep.subr.mxu0 0.0
    %243 = vmatpush1.msra.mxu0 %v219
    %244 = vmatprep.subr.mxu0 0.0
    %245 = vmatpush1.msra.mxu0 %v218
    %246 = vmatprep.subr.mxu0 0.0
    %247 = vmatpush1.msra.mxu0 %v217
    %248 = vmatprep.subr.mxu0 0.0
    %249 = vmatpush1.msra.mxu0 %v216
    %250 = vmatprep.subr.mxu0 0.0
    %251 = vmatpush1.msra.mxu0 %v215
    %252 = vmatprep.subr.mxu0 0.0
    %253 = vmatpush1.msra.mxu0 %v214
    %254 = vmatprep.subr.mxu0 0.0
    %255 = vmatpush1.msra.mxu0 %v213
    %256 = vmatprep.subr.mxu0 0.0
    %257 = vmatpush1.msra.mxu0 %v212
    %258 = vmatprep.subr.mxu0 0.0
    %259 = vmatpush1.msra.mxu0 %v211
    %260 = vmatprep.subr.mxu0 0.0
    %261 = vmatpush1.msra.mxu0 %v210
    %262 = vmatprep.subr.mxu0 0.0
    %263 = vmatpush1.msra.mxu0 %v209
    %264 = vmatprep.subr.mxu0 0.0
    %265 = vmatpush2.msra.mxu0 0.0
    %266 = vmatprep.subr.mxu0 0.0
    %267 = vmatpush2.msra.mxu0 0.0
    %268 = vmatprep.subr.mxu0 0.0
    %269 = vmatpush2.msra.mxu0 0.0
    %270 = vmatprep.subr.mxu0 0.0
    %271 = vmatpush2.msra.mxu0 0.0
    %272 = vmatprep.subr.mxu0 0.0
    %273 = vmatpush2.msra.mxu0 0.0
    %274 = vmatprep.subr.mxu0 0.0
    %275 = vmatpush2.msra.mxu0 0.0
    %276 = vmatprep.subr.mxu0 0.0
    %277 = vmatpush2.msra.mxu0 0.0
    %278 = vmatprep.subr.mxu0 0.0
    %279 = vmatpush2.msra.mxu0 0.0
    %280 = vmatprep.subr.mxu0 0.0
    %281 = vmatpush2.msra.mxu0 0.0
    %282 = vmatprep.subr.mxu0 0.0
    %283 = vmatpush2.msra.mxu0 0.0
    %284 = vmatprep.subr.mxu0 0.0
    %285 = vmatpush2.msra.mxu0 0.0
    %286 = vmatprep.subr.mxu0 0.0
    %287 = vmatpush2.msra.mxu0 0.0
    %288 = vmatprep.subr.mxu0 0.0
    %289 = vmatpush2.msra.mxu0 0.0
    %290 = vmatprep.subr.mxu0 0.0
    %291 = vmatpush2.msra.mxu0 0.0
    %292 = vmatprep.subr.mxu0 0.0
    %293 = vmatpush2.msra.mxu0 0.0
    %294 = vmatprep.subr.mxu0 0.0
    %295 = vmatpush2.msra.mxu0 0.0
    %296 = vmatprep.mubr.f32.mxu0 0.0
    %297 = vmatmul.mubr.f32.gmra.mxu0 %v208
    %v298 = vpop.f32.mrf.mxu0
    %v299 = vadd.f32 %v230, %v298
    %v300 = vpop.f32.mrf.mxu0
    %301 = vdwg.mxu0
    %vm302 = vcmask 64512
    %303 = vst.msk [vmem:[#allocation2] sm:$0xff] %vm302, %v299
    // Predicated region
    $region30: #{tpu_custom_call.1} parent=1 // pred_check
      _
    $region31: #{tpu_custom_call.1} parent=1 // pred_check_branch
      %305 = sbr.rel (0) target = $region33
    $region32: #{tpu_custom_call.1} parent=1 // pred_region
      %s307 = ssub.s32 128, 128
      %308 = vsyncadd [#allocation3], %s307
      %s310 = sshll.u32 [#allocation2], 4
      %s311 = int_to_ptr.vmem [resolvable:$true] %s310
      %313 = dma.vmem_to_hbm [thread:$0]  %s311, 128, %s7, [#allocation3]
    $region33: #{tpu_custom_call.1} parent=1 // pred_fallthru
      _
    // Predicated region
    $region34: #{tpu_custom_call.1} parent=1 // pred_check
      _
    $region35: #{tpu_custom_call.1} parent=1 // pred_check_branch
      %315 = sbr.rel (0) target = $region37
    $region36: #{tpu_custom_call.1} parent=1 // pred_region
      %316 = dma.done [#allocation3], 128
    $region37: #{tpu_custom_call.1} parent=1 // pred_fallthru
      _
    %317 = vsyncpa [#allocation3], 1

</llo_original>
